<compile_context>
chip_gen: v7x
topology: tpu7x:2x2x1
jax: 0.10.0
libtpu: 0.0.40
codegen_flags: <defaults>
</compile_context>

<pallas_src>
import functools
import math

import jax
import jax.numpy as jnp
from jax.experimental import pallas as pl
from jax.experimental.pallas import tpu as pltpu

_INV_SQRT2 = 0.7071067811865476
_SQRT_2_OVER_PI = 0.7978845608028654


def _round_up(v, m):
    return (v + m - 1) // m * m


def _pick_tile(dim, preferred, align):
    """Whole (aligned) dim if small, else the preferred tile."""
    padded = _round_up(dim, align)
    return padded if padded <= preferred else preferred


def _pick_div_tile(dim, preferred, step=128):
    """Largest multiple of `step` <= preferred that divides `dim` (dim % step == 0)."""
    t = min(preferred, dim)
    t = max((t // step) * step, step)
    while t > step and dim % t != 0:
        t -= step
    return t


def _gelu_f32(z, approximate):
    if approximate:
        # tanh approximation (opt-in): transcendental goes to the EUP slot.
        inner = jnp.float32(_SQRT_2_OVER_PI) * (z + jnp.float32(0.044715) * z * z * z)
        return 0.5 * z * (1.0 + jnp.tanh(inner))
    # exact erf GELU -- matches torch.nn.GELU() default.
    return 0.5 * z * (1.0 + jax.lax.erf(z * jnp.float32(_INV_SQRT2)))


def _maybe_cast(v, dt):
    # No-op when the operand is already stored in the compute dtype (the fast,
    # bandwidth-saving path); otherwise cast in-kernel (correct, but doesn't
    # reduce DMA bytes).
    if dt is not None and v.dtype != dt:
        return v.astype(dt)
    return v


# ----------------------------------------------------------------------------
# Kernels
# ----------------------------------------------------------------------------
def _kernel_single_k(*refs, compute_dtype, approximate, has_bias):
    """K fits in one tile: no accumulator scratch, no predicated init/finalize."""
    if has_bias:
        x_ref, w_ref, b_ref, o_ref = refs
    else:
        x_ref, w_ref, o_ref = refs
        b_ref = None
    z = jnp.dot(
        _maybe_cast(x_ref[...], compute_dtype),
        _maybe_cast(w_ref[...], compute_dtype),
        preferred_element_type=jnp.float32,
    )
    if b_ref is not None:
        z = z + b_ref[...].astype(jnp.float32)
    o_ref[...] = _gelu_f32(z, approximate).astype(o_ref.dtype)


def _kernel_multi_k(*refs, compute_dtype, approximate, has_bias):
    """General case: reduce over the K grid axis into an f32 VMEM accumulator."""
    if has_bias:
        x_ref, w_ref, b_ref, o_ref, acc_ref = refs
    else:
        x_ref, w_ref, o_ref, acc_ref = refs
        b_ref = None

    k = pl.program_id(2)
    part = jnp.dot(
        _maybe_cast(x_ref[...], compute_dtype),
        _maybe_cast(w_ref[...], compute_dtype),
        preferred_element_type=jnp.float32,
    )

    # Write the first partial directly (saves a zero-init store + RMW per tile).
    @pl.when(k == 0)
    def _():
        acc_ref[...] = part

    @pl.when(k != 0)
    def _():
        acc_ref[...] += part

    @pl.when(k == pl.num_programs(2) - 1)
    def _():
        z = acc_ref[...]
        if b_ref is not None:
            z = z + b_ref[...].astype(jnp.float32)
        o_ref[...] = _gelu_f32(z, approximate).astype(o_ref.dtype)


# ----------------------------------------------------------------------------
# One-time weight preparation (init-step, not per call)
# ----------------------------------------------------------------------------
def prepare_weight(weight_out_in, compute_dtype=jnp.bfloat16):
    """PyTorch (out_features, in_features) -> (Kp, Np):
    transpose once, cast to the compute/storage dtype once, zero-pad K and N to
    multiples of 128 once.  Nothing weight-related happens per call after this."""
    w = jnp.asarray(weight_out_in).T  # (K, N)
    if compute_dtype is not None:
        w = w.astype(compute_dtype)
    K, N = w.shape
    Kp, Np = _round_up(K, 128), _round_up(N, 128)
    if (Kp, Np) != (K, N):
        w = jnp.pad(w, ((0, Kp - K), (0, Np - N)))
    return w


# ----------------------------------------------------------------------------
# Hardware-aware defaults
# ----------------------------------------------------------------------------
def _tpu_generation():
    try:
        kind = jax.devices()[0].device_kind.lower()
    except Exception:
        return "unknown"
    if "v7" in kind:
        return "v7x"
    if "v6" in kind:
        return "v6e"
    if "v5 lite" in kind or "v5lite" in kind or "v5e" in kind:
        return "v5e"
    return "unknown"


def _tile_prefs(op_bytes, gen):
    if gen == "v6e":
        return 1536, 512           # big output tiles: ridge ~650 FLOP/B
    if gen == "v7x":
        return 1024, 512           # 64 MiB VMEM -> don't copy the v6e tile
    if gen == "v5e":
        return 512, (1024 if op_bytes <= 2 else 512)
    return 1024, 512               # conservative default


def _vmem_limit_bytes():
    # ~3/4 of physical VMEM, capped at 96 MiB: ~96 MiB on v5e/v6e (128 MiB
    # physical), ~48 MiB on v7x (64 MiB physical).
    try:
        cap = pltpu.get_tpu_info().vmem_capacity_bytes
        return int(min(96 * 1024 * 1024, cap * 3 // 4))
    except Exception:
        return 48 * 1024 * 1024


def _make_in_spec(block_shape, index_map, bufs):
    if bufs is not None:
        try:
            return pl.BlockSpec(block_shape, index_map, pipeline_mode=pl.Buffered(bufs))
        except Exception:
            pass
    return pl.BlockSpec(block_shape, index_map)


# ----------------------------------------------------------------------------
# Public entry point
# ----------------------------------------------------------------------------
@functools.partial(
    jax.jit,
    static_argnames=("out_features", "tm", "tn", "tk", "compute_dtype",
                     "approximate", "out_dtype"),
)
def linear_gelu(
    x,
    w_kn,
    bias=None,
    *,
    out_features=None,
    tm=None,
    tn=None,
    tk=None,
    compute_dtype=jnp.bfloat16,
    approximate=False,
    out_dtype=None,
):
    """GELU(x @ w_kn + bias).

    x:      (..., K)   -- ideally stored in bf16 (halves activation DMA); f32 works too.
    w_kn:   (Kp, Np)   -- from prepare_weight(): transposed, compute-dtype, 128-padded.
    bias:   (N,) or None (None skips bias DMA/add entirely).
    out_features: original N (needed if prepare_weight padded N).
    """
    orig_shape = x.shape
    Kx = orig_shape[-1]
    Kp, Np = w_kn.shape

    # Fallback for weights not run through prepare_weight() (slow path: per-call pad).
    if Kp % 128 != 0 or Np % 128 != 0:
        if out_features is None:
            out_features = Np
        Kp2, Np2 = _round_up(Kp, 128), _round_up(Np, 128)
        if (Kp2, Np2) != (Kp, Np):
            w_kn = jnp.pad(w_kn, ((0, Kp2 - Kp), (0, Np2 - Np)))
        Kp, Np = Kp2, Np2
    n_out = out_features if out_features is not None else Np
    assert Kx <= Kp, f"x K ({Kx}) exceeds prepared weight K ({Kp})"

    M = 1
    for d in orig_shape[:-1]:
        M *= d
    x2d = x.reshape(M, Kx)

    has_bias = bias is not None
    if has_bias:
        b2d = bias.reshape(1, -1)
        if b2d.shape[1] < Np:
            b2d = jnp.pad(b2d, ((0, 0), (0, Np - b2d.shape[1])))

    # ---- tile selection (per generation, roofline-sized) ----
    gen = _tpu_generation()
    op_bytes = (
        jnp.dtype(compute_dtype).itemsize
        if compute_dtype is not None
        else jnp.dtype(x.dtype).itemsize
    )
    t_pref, tk_pref = _tile_prefs(op_bytes, gen)

    x_bytes = jnp.dtype(x.dtype).itemsize
    m_align = 8 if x_bytes >= 4 else (16 if x_bytes == 2 else 32)

    tm = tm or _pick_tile(M, t_pref, m_align)
    tn = tn or _pick_div_tile(Np, t_pref)
    tk = tk or _pick_div_tile(Kp, tk_pref)

    # v7x has 2 TensorCores: make sure the parallel grid has >= 2 blocks.
    if gen == "v7x" and M <= tm and Np <= tn and Np >= 256 and Np % 256 == 0:
        tn = Np // 2

    # ---- padding: K (zeros contribute 0 to the dot) and M (sliced off) ----
    Mp = _round_up(M, tm)
    if Mp != M or Kx != Kp:
        x2d = jnp.pad(x2d, ((0, Mp - M), (0, Kp - Kx)))

    grid_k = Kp // tk
    out_dtype = out_dtype if out_dtype is not None else x.dtype

    if grid_k == 1:
        kernel = functools.partial(
            _kernel_single_k,
            compute_dtype=compute_dtype, approximate=approximate, has_bias=has_bias,
        )
        in_specs = [
            pl.BlockSpec((tm, Kp), lambda i, j: (i, 0)),   # x tile (full K)
            pl.BlockSpec((Kp, tn), lambda i, j: (0, j)),   # w tile (full K)
        ]
        if has_bias:
            in_specs.append(pl.BlockSpec((1, tn), lambda i, j: (0, j)))
        grid_spec = pltpu.PrefetchScalarGridSpec(
            num_scalar_prefetch=0,
            grid=(Mp // tm, Np // tn),
            in_specs=in_specs,
            out_specs=pl.BlockSpec((tm, tn), lambda i, j: (i, j)),
        )
        dim_sem = ("parallel", "parallel")
    else:
        kernel = functools.partial(
            _kernel_multi_k,
            compute_dtype=compute_dtype, approximate=approximate, has_bias=has_bias,
        )
        # v5e sits right at the roofline ridge at these tiles -> 3-deep buffering
        # on the streamed operands hides DMA jitter / first-tile latency.
        bufs = 3 if (gen == "v5e" and grid_k >= 3) else None
        in_specs = [
            _make_in_spec((tm, tk), lambda i, j, k: (i, k), bufs),   # x tile
            _make_in_spec((tk, tn), lambda i, j, k: (k, j), bufs),   # w tile
        ]
        if has_bias:
            in_specs.append(pl.BlockSpec((1, tn), lambda i, j, k: (0, j)))
        grid_spec = pltpu.PrefetchScalarGridSpec(
            num_scalar_prefetch=0,
            grid=(Mp // tm, Np // tn, grid_k),
            in_specs=in_specs,
            out_specs=pl.BlockSpec((tm, tn), lambda i, j, k: (i, j)),
            scratch_shapes=[pltpu.VMEM((tm, tn), jnp.float32)],
        )
        dim_sem = ("parallel", "parallel", "arbitrary")

    operands = [x2d, w_kn] + ([b2d] if has_bias else [])
    out = pl.pallas_call(
        kernel,
        out_shape=jax.ShapeDtypeStruct((Mp, Np), out_dtype),
        grid_spec=grid_spec,
        compiler_params=pltpu.CompilerParams(
            dimension_semantics=dim_sem,
            vmem_limit_bytes=_vmem_limit_bytes(),
        ),
    )(*operands)

    if (Mp, Np) != (M, n_out):
        out = out[:M, :n_out]
    return out.reshape(*orig_shape[:-1], n_out)


if __name__ == "__main__":
    # Small shapes implied by a linear fusion on a (batch, seq, hidden) activation.
    batch, seq, in_features, out_features = 2, 8, 32, 64

    key = jax.random.PRNGKey(0)
    kx, kw, kb = jax.random.split(key, 3)

    x = jax.random.normal(kx, (batch, seq, in_features), dtype=jnp.float32)
    bound = 1.0 / math.sqrt(in_features)
    weight = jax.random.uniform(
        kw, (out_features, in_features), minval=-bound, maxval=bound, dtype=jnp.float32
    )
    bias = jax.random.uniform(
        kb, (out_features,), minval=-bound, maxval=bound, dtype=jnp.float32
    )

    # One-time weight prep: transpose + bf16 cast + 128-pad, never per call.
    w_kn = jax.device_put(prepare_weight(weight))

    y = linear_gelu(x, w_kn, bias, out_features=out_features)
    y = jax.block_until_ready(y)
    assert y.shape == (batch, seq, out_features)
    assert y.dtype == x.dtype

    # Reference 1: identical math path (bf16 MXU operands, f32 accum, erf GELU).
    x2d = x.reshape(-1, in_features)
    zb = (
        jnp.dot(
            x2d.astype(jnp.bfloat16),
            weight.T.astype(jnp.bfloat16),
            preferred_element_type=jnp.float32,
        )
        + bias
    )
    ref_b = (0.5 * zb * (1.0 + jax.lax.erf(zb * _INV_SQRT2))).reshape(
        batch, seq, out_features
    )
    assert jnp.allclose(y.astype(jnp.float32), ref_b, atol=2e-3, rtol=2e-3)

    # Reference 2: exact f32 nn.GELU(nn.Linear(x)) semantics (loose tol for bf16 MXU).
    zf = x @ weight.T + bias
    ref_f = 0.5 * zf * (1.0 + jax.lax.erf(zf * _INV_SQRT2))
    assert jnp.allclose(y.astype(jnp.float32), ref_f, atol=5e-2, rtol=5e-2)

    # No-bias fast path (skips bias DMA + epilogue add entirely).
    y_nb = jax.block_until_ready(linear_gelu(x, w_kn, out_features=out_features))
    zf_nb = x @ weight.T
    ref_nb = 0.5 * zf_nb * (1.0 + jax.lax.erf(zf_nb * _INV_SQRT2))
    assert jnp.allclose(y_nb.astype(jnp.float32), ref_nb, atol=5e-2, rtol=5e-2)

    print("KERNEL_OK")
</pallas_src>

<mosaic_0001>
module attributes {stable_mosaic.version = 11 : i64} {
  func.func @_kernel_single_k(%arg0: i32, %arg1: i32, %arg2: memref<16x128xf32, #tpu.memory_space<vmem>>, %arg3: memref<128x128xbf16, #tpu.memory_space<vmem>>, %arg4: memref<1x128xf32, #tpu.memory_space<vmem>>, %arg5: memref<16x128xf32, #tpu.memory_space<vmem>>) attributes {dimension_semantics = [#tpu.dimension_semantics<parallel>, #tpu.dimension_semantics<parallel>], iteration_bounds = array<i64: 1, 1>, scalar_prefetch = 0 : i64, scratch_operands = 0 : i64, tpu.core_type = #tpu.core_type<tc>, window_params = [{transform_indices = @transform_0, window_bounds = array<i64: 16, 128>}, {transform_indices = @transform_1, window_bounds = array<i64: 128, 128>}, {transform_indices = @transform_2, window_bounds = array<i64: 1, 128>}, {transform_indices = @transform_3, window_bounds = array<i64: 16, 128>}]} {
    %c0 = arith.constant 0 : index
    %c0_0 = arith.constant 0 : index
    %0 = vector.load %arg2[%c0, %c0_0] : memref<16x128xf32, #tpu.memory_space<vmem>>, vector<16x128xf32>
    %1 = arith.truncf %0 : vector<16x128xf32> to vector<16x128xbf16>
    %c0_1 = arith.constant 0 : index
    %c0_2 = arith.constant 0 : index
    %2 = vector.load %arg3[%c0_1, %c0_2] : memref<128x128xbf16, #tpu.memory_space<vmem>>, vector<128x128xbf16>
    %cst = arith.constant dense<0.000000e+00> : vector<16x128xf32>
    %3 = tpu.matmul %1, %2, %cst {dimension_numbers = #tpu.dot_dimension_numbers<[1], [0], [0], [1], [0, 0, 1, 1], [], []>} : vector<16x128xbf16>, vector<128x128xbf16>, vector<16x128xf32> -> vector<16x128xf32>
    %c0_3 = arith.constant 0 : index
    %c0_4 = arith.constant 0 : index
    %4 = vector.load %arg4[%c0_3, %c0_4] : memref<1x128xf32, #tpu.memory_space<vmem>>, vector<1x128xf32>
    %5 = vector.broadcast %4 : vector<1x128xf32> to vector<16x128xf32>
    %6 = arith.addf %3, %5 : vector<16x128xf32>
    %cst_5 = arith.constant 5.000000e-01 : f32
    %7 = vector.broadcast %cst_5 : f32 to vector<16x128xf32>
    %8 = arith.mulf %7, %6 : vector<16x128xf32>
    %cst_6 = arith.constant 0.707106769 : f32
    %9 = vector.broadcast %cst_6 : f32 to vector<16x128xf32>
    %10 = arith.mulf %6, %9 : vector<16x128xf32>
    %11 = math.erf %10 : vector<16x128xf32>
    %cst_7 = arith.constant 1.000000e+00 : f32
    %12 = vector.broadcast %cst_7 : f32 to vector<16x128xf32>
    %13 = arith.addf %12, %11 : vector<16x128xf32>
    %14 = arith.mulf %8, %13 : vector<16x128xf32>
    %c0_8 = arith.constant 0 : index
    %c0_9 = arith.constant 0 : index
    %15 = vector.load %arg5[%c0_8, %c0_9] : memref<16x128xf32, #tpu.memory_space<vmem>>, vector<16x128xf32>
    tpu.vector_store %arg5[%c0_8, %c0_9], %14 {strides = array<i32>} : memref<16x128xf32, #tpu.memory_space<vmem>>, vector<16x128xf32>,
    return
  }
  func.func @transform_0(%arg0: i32, %arg1: i32) -> (i32, i32) {
    %c0_i32 = arith.constant 0 : i32
    %c0_i32_0 = arith.constant 0 : i32
    return %arg0, %c0_i32 : i32, i32
  }
  func.func @transform_1(%arg0: i32, %arg1: i32) -> (i32, i32) {
    %c0_i32 = arith.constant 0 : i32
    %c0_i32_0 = arith.constant 0 : i32
    return %c0_i32, %arg1 : i32, i32
  }
  func.func @transform_2(%arg0: i32, %arg1: i32) -> (i32, i32) {
    %c0_i32 = arith.constant 0 : i32
    %c0_i32_0 = arith.constant 0 : i32
    return %c0_i32, %arg1 : i32, i32
  }
  func.func @transform_3(%arg0: i32, %arg1: i32) -> (i32, i32) {
    %c0_i32 = arith.constant 0 : i32
    return %arg0, %arg1 : i32, i32
  }
}

</mosaic_0001>

<llo_original>
// kernel: linear_gelu.1
$region0: #{linear_gelu.1}
  #allocation0 [shape = 'u32[]', space=smem, size = 0x4, offset = 0x4, fixed_abs, tag = 'smem constant byte address 0x4 - core index']
  #allocation1 [shape = 'u32[144,128]{1,0:T(1,128)}', space=vmem, size = 0x12000, scoped, tag = 'internal scratch']
  %s0 = inlined_call_operand.vmem [shape: f32[16,128], index: 0, kind: input, shape index: {}]
  %s1 = inlined_call_operand.hbm [shape: bf16[128,128], index: 1, kind: input, shape index: {}]
  %s2 = inlined_call_operand.vmem [shape: f32[1,128], index: 2, kind: input, shape index: {}]
  %s3 = inlined_call_operand.vmem [shape: f32[16,128], index: 3, kind: output, shape index: {}]
  %s4 = sld [smem:[#allocation0]]
  $region26: #{linear_gelu.1} parent=0
    _
  %s6 = ssub.s32 1, %s4
  %s7 = scalar_select 0, %s6, %s4
  $region1: #{linear_gelu.1} parent=0
    #allocation2 [shape = 'u8[32768]{0}', space=vmem, size = 0x8000, scoped, tag = 'input window, operand 1, single buffered']
    #allocation3 [shape = 's32[1]{0}', space=sflag, size = 0x4, scoped, tag = 'scoped memory for linear_gelu.1']
    %8 = vsyncpa [#allocation3], 0
    // Predicated region
    $region2: #{linear_gelu.1} parent=1 // pred_check
      _
    $region3: #{linear_gelu.1} parent=1 // pred_check_branch
      %10 = sbr.rel (0) target = $region5
    $region4: #{linear_gelu.1} parent=1 // pred_region
      _
    $region5: #{linear_gelu.1} parent=1 // pred_fallthru
      _
    // Predicated region
    $region6: #{linear_gelu.1} parent=1 // pred_check
      _
    $region7: #{linear_gelu.1} parent=1 // pred_check_branch
      %12 = sbr.rel (0) target = $region9
    $region8: #{linear_gelu.1} parent=1 // pred_region
      %s14 = ssub.s32 1024, 1024
      %15 = vsyncadd [#allocation3], %s14
      %s16 = sshll.u32 [#allocation2], 4
      %s17 = int_to_ptr.vmem [resolvable:$true] %s16
      %22 = dma.hbm_to_vmem [thread:$0]  %s1, 1024, %s17, [#allocation3], 64, 64, 4
    $region9: #{linear_gelu.1} parent=1 // pred_fallthru
      _
    // Predicated region
    $region10: #{linear_gelu.1} parent=1 // pred_check
      _
    $region11: #{linear_gelu.1} parent=1 // pred_check_branch
      %24 = sbr.rel (0) target = $region13
    $region12: #{linear_gelu.1} parent=1 // pred_region
      _
    $region13: #{linear_gelu.1} parent=1 // pred_fallthru
      _
    // Predicated region
    $region14: #{linear_gelu.1} parent=1 // pred_check
      _
    $region15: #{linear_gelu.1} parent=1 // pred_check_branch
      %26 = sbr.rel (0) target = $region17
    $region16: #{linear_gelu.1} parent=1 // pred_region
      %27 = dma.done [#allocation3], 1024
    $region17: #{linear_gelu.1} parent=1 // pred_fallthru
      _
    %v29 = vld [vmem:[%s0] sm:$0xff]
    %v30 = vld [vmem:[%s0 + $0x8] sm:$0xff]
    %v31 = vpack.c.bf16 %v30, %v29
    %v32 = vld [vmem:[#allocation2] sm:$0xf]
    %v33 = vld [vmem:[#allocation2 + $0x4] sm:$0xf]
    %v34 = vld [vmem:[#allocation2 + $0x8] sm:$0xf]
    %v35 = vld [vmem:[#allocation2 + $0xc] sm:$0xf]
    %v36 = vld [vmem:[#allocation2 + $0x10] sm:$0xf]
    %v37 = vld [vmem:[#allocation2 + $0x14] sm:$0xf]
    %v38 = vld [vmem:[#allocation2 + $0x18] sm:$0xf]
    %v39 = vld [vmem:[#allocation2 + $0x1c] sm:$0xf]
    %v40 = vld [vmem:[#allocation2 + $0x20] sm:$0xf]
    %v41 = vld [vmem:[#allocation2 + $0x24] sm:$0xf]
    %v42 = vld [vmem:[#allocation2 + $0x28] sm:$0xf]
    %v43 = vld [vmem:[#allocation2 + $0x2c] sm:$0xf]
    %v44 = vld [vmem:[#allocation2 + $0x30] sm:$0xf]
    %v45 = vld [vmem:[#allocation2 + $0x34] sm:$0xf]
    %v46 = vld [vmem:[#allocation2 + $0x38] sm:$0xf]
    %v47 = vld [vmem:[#allocation2 + $0x3c] sm:$0xf]
    %v48 = vld [vmem:[%s2] sm:$0x1]
    %v50 = vlaneseq
    %v51 = vshrl.u32 %v50, 7
    %v52 = vsub.s32 0, %v51
    %v53 = vrot.slane %v48, %v52
    %v71 = vunpack.c.l.b16 %v32
    %v72 = vunpack.c.l.b16 %v33
    %v73 = vunpack.c.l.b16 %v34
    %v74 = vunpack.c.l.b16 %v35
    %v75 = vunpack.c.l.b16 %v36
    %v76 = vunpack.c.l.b16 %v37
    %v77 = vunpack.c.l.b16 %v38
    %v78 = vunpack.c.l.b16 %v39
    %v79 = vunpack.c.l.b16 %v40
    %v80 = vunpack.c.l.b16 %v41
    %v81 = vunpack.c.l.b16 %v42
    %v82 = vunpack.c.l.b16 %v43
    %v83 = vunpack.c.l.b16 %v44
    %v84 = vunpack.c.l.b16 %v45
    %v85 = vunpack.c.l.b16 %v46
    %v86 = vunpack.c.l.b16 %v47
    %v87 = vpack.c.b16 %v72, %v71
    %v88 = vpack.c.b16 %v74, %v73
    %v89 = vpack.c.b16 %v76, %v75
    %v90 = vpack.c.b16 %v78, %v77
    %v91 = vpack.c.b16 %v80, %v79
    %v92 = vpack.c.b16 %v82, %v81
    %v93 = vpack.c.b16 %v84, %v83
    %v94 = vpack.c.b16 %v86, %v85
    %103 = vmatprep.subr.bf16.mxu0 0
    %104 = vmatpush1.bf16.msra.mxu0 %v87
    %105 = vmatprep.subr.bf16.mxu0 0
    %106 = vmatpush1.bf16.msra.mxu0 %v88
    %107 = vmatprep.subr.bf16.mxu0 0
    %108 = vmatpush1.bf16.msra.mxu0 %v89
    %109 = vmatprep.subr.bf16.mxu0 0
    %110 = vmatpush1.bf16.msra.mxu0 %v90
    %111 = vmatprep.subr.bf16.mxu0 0
    %112 = vmatpush1.bf16.msra.mxu0 %v91
    %113 = vmatprep.subr.bf16.mxu0 0
    %114 = vmatpush1.bf16.msra.mxu0 %v92
    %115 = vmatprep.subr.bf16.mxu0 0
    %116 = vmatpush1.bf16.msra.mxu0 %v93
    %117 = vmatprep.subr.bf16.mxu0 0
    %118 = vmatpush1.bf16.msra.mxu0 %v94
    %119 = vmatprep.subr.bf16.mxu0 0
    %120 = vmatpush1.bf16.msra.mxu0 0
    %121 = vmatprep.subr.bf16.mxu0 0
    %122 = vmatpush1.bf16.msra.mxu0 0
    %123 = vmatprep.subr.bf16.mxu0 0
    %124 = vmatpush1.bf16.msra.mxu0 0
    %125 = vmatprep.subr.bf16.mxu0 0
    %126 = vmatpush1.bf16.msra.mxu0 0
    %127 = vmatprep.subr.bf16.mxu0 0
    %128 = vmatpush1.bf16.msra.mxu0 0
    %129 = vmatprep.subr.bf16.mxu0 0
    %130 = vmatpush1.bf16.msra.mxu0 0
    %131 = vmatprep.subr.bf16.mxu0 0
    %132 = vmatpush1.bf16.msra.mxu0 0
    %133 = vmatprep.subr.bf16.mxu0 0
    %134 = vmatpush1.bf16.msra.mxu0 0
    %135 = vmatprep.mubr.bf16.mxu0 0
    %136 = vmatmul.mubr.bf16.gmra.mrb[0].mxu0 %v31
    %v137 = vpop.f32.mrb[0].mxu0
    %v138 = vadd.f32 %v53, %v137
    %v139 = vpop.f32.mrb[0].mxu0
    %v140 = vpop.f32.mrb[0].mxu0
    %v141 = vadd.f32 %v53, %v140
    %v142 = vpop.f32.mrb[0].mxu0
    %143 = vdwg.mxu0
    %v144 = vmul.f32 %v138, 0.5
    %v145 = vmul.f32 %v141, 0.5
    %v146 = vmul.f32 %v138, 0.70710677
    %v147 = vmul.f32 %v141, 0.70710677
    %v148 = verf.f32.pop %v146
    %v149 = verf.f32.pop %v147
    %v150 = vadd.f32 %v148, 1.0
    %v151 = vadd.f32 %v149, 1.0
    %v152 = vmul.f32 %v144, %v150
    %v153 = vmul.f32 %v145, %v151
    %154 = vst [vmem:[%s3] sm:$0xff] %v152
    %155 = vst [vmem:[%s3 + $0x8] sm:$0xff] %v153
    // Predicated region
    $region18: #{linear_gelu.1} parent=1 // pred_check
      _
    $region19: #{linear_gelu.1} parent=1 // pred_check_branch
      %157 = sbr.rel (0) target = $region21
    $region20: #{linear_gelu.1} parent=1 // pred_region
      _
    $region21: #{linear_gelu.1} parent=1 // pred_fallthru
      _
    // Predicated region
    $region22: #{linear_gelu.1} parent=1 // pred_check
      _
    $region23: #{linear_gelu.1} parent=1 // pred_check_branch
      %159 = sbr.rel (0) target = $region25
    $region24: #{linear_gelu.1} parent=1 // pred_region
      _
    $region25: #{linear_gelu.1} parent=1 // pred_fallthru
      _
    %160 = vsyncpa [#allocation3], 1

</llo_original>
